<compile_context>
chip_gen: v5e
topology: v5e:2x2
jax: 0.10.0
libtpu: 0.0.40
codegen_flags: <defaults>
</compile_context>

<pallas_src>
import functools

import jax
import jax.numpy as jnp
from jax.experimental import pallas as pl
from jax.experimental.pallas import tpu as pltpu

LN_EPS = 1e-5       # PyTorch nn.LayerNorm default
ROW_ALIGN = 16      # bf16 sublane packing: 16 rows per packed vreg sublane group
LANE = 128


def _round_up(x, m):
    return ((x + m - 1) // m) * m


def _cdiv(a, b):
    return (a + b - 1) // b


def _tpu_config():
    """Per-generation (vmem_budget_bytes, default_block_rows, multi_tensorcore)."""
    kind = ""
    try:
        kind = jax.devices()[0].device_kind.lower()
    except Exception:
        pass
    vmem_phys = None
    try:
        vmem_phys = int(pltpu.get_tpu_info().vmem_capacity_bytes)
    except Exception:
        pass
    if vmem_phys is None:
        vmem_phys = (64 << 20) if "v7" in kind else (128 << 20)
    if vmem_phys <= (64 << 20):
        # v7x: 64 MiB per TC physical -> leave ~12 MiB headroom for compiler scratch.
        vmem_cap = max(vmem_phys - (12 << 20), 32 << 20)
        block_rows = 256
    else:
        # v5e / v6e: 128 MiB physical -> use up to ~104 MiB.
        vmem_cap = min(104 << 20, vmem_phys - (24 << 20))
        block_rows = 512
    multi_tc = "v7" in kind   # 2 TensorCores per chip on v7x
    return vmem_cap, block_rows, multi_tc


def _vmem_estimate(tm, d, th, n_h, o_pad, x_item, c_item, out_item):
    w_bufs = 1 if n_h == 1 else 2            # weight blocks: 1 buffer when invariant
    return (2 * tm * d * x_item              # x tile, double-buffered
            + w_bufs * d * th * c_item       # w1 chunk(s)
            + w_bufs * th * 4                # b1 chunk(s)
            + w_bufs * th * o_pad * c_item   # w2 chunk(s)
            + 3 * o_pad * 4                  # b2 / gamma / beta (single-buffered)
            + 2 * tm * o_pad * out_item      # out tile, double-buffered
            + tm * o_pad * 4                 # f32 accumulator scratch
            + tm * th * 6                    # live h (f32 + bf16 copy)
            + tm * o_pad * 4)                # live partial product


def _rowwise_encoder_kernel(x_ref, w1_ref, b1_ref, w2_ref, b2_ref,
                            gamma_ref, beta_ref, o_ref, acc_ref,
                            *, out_dim, n_h, compute_dtype):
    k = pl.program_id(1)

    # Cast activations to the MXU dtype in-kernel (free VPU work under the MXU;
    # avoids a separate wrapper-side HBM cast pass over x).
    x = x_ref[...].astype(compute_dtype)

    # Linear 1 chunk + ReLU (f32 accumulation, f32 elementwise).
    h = jnp.dot(x, w1_ref[...], preferred_element_type=jnp.float32)
    h = jnp.maximum(h + b1_ref[...], 0.0)

    # Linear 2 chunk.
    part = jnp.dot(h.astype(compute_dtype), w2_ref[...],
                   preferred_element_type=jnp.float32)

    o_pad = o_ref.shape[-1]
    pad_cols = o_pad - out_dim
    inv_o = 1.0 / out_dim

    def _finish(y):
        # LayerNorm over the real (unpadded) feature columns.  Padded columns of
        # y are exactly zero (w2/b2 are zero-padded inside the wrapper), so the
        # plain row sum is already correct; the centered sum only needs an exact
        # `pad_cols * mean^2` correction (centered == -mean on padded columns).
        mean = jnp.sum(y, axis=-1, keepdims=True) * inv_o
        centered = y - mean
        ss = jnp.sum(centered * centered, axis=-1, keepdims=True)
        if pad_cols:
            ss = ss - pad_cols * (mean * mean)
        var = jnp.maximum(ss * inv_o, 0.0)
        y_hat = centered * jax.lax.rsqrt(var + LN_EPS)
        # gamma/beta are zero on padded columns -> padded output columns are 0.
        o_ref[...] = (y_hat * gamma_ref[...] + beta_ref[...]).astype(o_ref.dtype)

    if n_h == 1:
        _finish(part + b2_ref[...])
    else:
        @pl.when(k == 0)
        def _():
            acc_ref[...] = part

        @pl.when(k > 0)
        def _():
            acc_ref[...] += part

        @pl.when(k == n_h - 1)
        def _():
            _finish(acc_ref[...] + b2_ref[...])


@functools.partial(jax.jit,
                   static_argnames=("block_rows", "block_h", "compute_dtype",
                                    "out_dtype"))
def rowwise_encoder(x, w1, b1, w2, b2, gamma, beta, *,
                    block_rows=None, block_h=512, compute_dtype=jnp.bfloat16,
                    out_dtype=None):
    B, N, D = x.shape
    H = w1.shape[1]
    O = w2.shape[1]
    M = B * N

    out_dtype = x.dtype if out_dtype is None else out_dtype
    x_item = jnp.dtype(x.dtype).itemsize
    c_item = jnp.dtype(compute_dtype).itemsize
    out_item = jnp.dtype(out_dtype).itemsize

    vmem_cap, default_rows, multi_tc = _tpu_config()
    if block_rows is None:
        block_rows = default_rows

    # Lane-dense output: pad the output feature dim to a multiple of 128 so the
    # per-row store is a full-width vst.
    O_pad = _round_up(O, LANE)

    # H (reduction) tiling: one resident chunk when H is small enough, otherwise
    # 128-aligned chunks accumulated over an "arbitrary" grid axis.
    block_h = max(LANE, _round_up(block_h, LANE))
    tH = H if H <= block_h else block_h

    # Row tile: generation default (256 on v7x, 512 on v5e/v6e), aligned to 16
    # (bf16 sublane packing), clamped to the row count.
    tm = _round_up(min(block_rows, _round_up(M, ROW_ALIGN)), ROW_ALIGN)
    # On v7x ensure the "parallel" row axis has >= 2 steps so both TCs get work.
    if multi_tc and _cdiv(M, tm) < 2 and M >= 2 * ROW_ALIGN:
        tm = _round_up(_cdiv(M, 2), ROW_ALIGN)

    # Shrink tiles until the kernel fits this generation's VMEM budget.
    budget = int(vmem_cap * 0.85)
    while _vmem_estimate(tm, D, tH, _cdiv(H, tH), O_pad,
                         x_item, c_item, out_item) > budget:
        if tm > 128:
            tm = max(128, _round_up(tm // 2, ROW_ALIGN))
        elif tH > LANE:
            tH = max(LANE, _round_up(tH // 2, LANE))
        elif tm > ROW_ALIGN:
            tm = max(ROW_ALIGN, _round_up(tm // 2, ROW_ALIGN))
        else:
            break

    nH = _cdiv(H, tH)
    H_pad = nH * tH
    num_rt = _cdiv(M, tm)
    M_pad = num_rt * tm

    # --- prepare inputs (x stays in its original dtype; the kernel casts it) ---
    x2d = x.reshape(M, D)
    if M_pad != M:
        x2d = jnp.pad(x2d, ((0, M_pad - M), (0, 0)))

    w1c = w1.astype(compute_dtype)
    w2c = w2.astype(compute_dtype)
    b1f = b1.astype(jnp.float32)
    if H_pad != H:
        w1c = jnp.pad(w1c, ((0, 0), (0, H_pad - H)))
        b1f = jnp.pad(b1f, ((0, H_pad - H),))
        w2c = jnp.pad(w2c, ((0, H_pad - H), (0, 0)))
    b2f = b2.astype(jnp.float32)
    gf = gamma.astype(jnp.float32)
    btf = beta.astype(jnp.float32)
    if O_pad != O:
        w2c = jnp.pad(w2c, ((0, 0), (0, O_pad - O)))
        b2f = jnp.pad(b2f, ((0, O_pad - O),))
        gf = jnp.pad(gf, ((0, O_pad - O),))
        btf = jnp.pad(btf, ((0, O_pad - O),))

    b1_2d = b1f.reshape(1, H_pad)
    b2_2d = b2f.reshape(1, O_pad)
    gamma_2d = gf.reshape(1, O_pad)
    beta_2d = btf.reshape(1, O_pad)

    # --- specs: single-buffer the grid-invariant operands ---
    def _spec(shape, imap, single=False):
        if single:
            return pl.BlockSpec(shape, imap, pipeline_mode=pl.Buffered(1))
        return pl.BlockSpec(shape, imap)

    w_single = (nH == 1)   # w1/b1/w2 are grid-invariant only when H is one chunk
    in_specs = [
        _spec((tm, D), lambda i, k: (i, 0)),                       # x rows tile
        _spec((D, tH), lambda i, k: (0, k), single=w_single),      # w1 chunk
        _spec((1, tH), lambda i, k: (0, k), single=w_single),      # b1 chunk
        _spec((tH, O_pad), lambda i, k: (k, 0), single=w_single),  # w2 chunk
        _spec((1, O_pad), lambda i, k: (0, 0), single=True),       # b2
        _spec((1, O_pad), lambda i, k: (0, 0), single=True),       # ln gamma
        _spec((1, O_pad), lambda i, k: (0, 0), single=True),       # ln beta
    ]
    out_spec = pl.BlockSpec((tm, O_pad), lambda i, k: (i, 0))

    est = _vmem_estimate(tm, D, tH, nH, O_pad, x_item, c_item, out_item)
    vmem_limit = max(16 << 20, min(int(est * 1.3) + (4 << 20), vmem_cap))

    weight_bytes = (D * H_pad + H_pad * O_pad) * c_item + (H_pad + 3 * O_pad) * 4
    weight_reads = 1 if nH == 1 else num_rt
    cost = pl.CostEstimate(
        flops=2 * M_pad * (D * H_pad + H_pad * O_pad),
        transcendentals=M_pad,
        bytes_accessed=(M_pad * D * x_item + weight_reads * weight_bytes
                        + M_pad * O_pad * out_item))

    kernel = functools.partial(_rowwise_encoder_kernel, out_dim=O, n_h=nH,
                               compute_dtype=compute_dtype)

    out = pl.pallas_call(
        kernel,
        out_shape=jax.ShapeDtypeStruct((M_pad, O_pad), out_dtype),
        grid_spec=pltpu.PrefetchScalarGridSpec(
            num_scalar_prefetch=0,
            grid=(num_rt, nH),                      # rows parallel, H reduction last
            in_specs=in_specs,
            out_specs=out_spec,
            scratch_shapes=[pltpu.VMEM((tm, O_pad), jnp.float32)],
        ),
        compiler_params=pltpu.CompilerParams(
            dimension_semantics=("parallel", "arbitrary"),
            vmem_limit_bytes=vmem_limit),
        cost_estimate=cost,
    )(x2d, w1c, b1_2d, w2c, b2_2d, gamma_2d, beta_2d)

    return out[:M, :O].reshape(B, N, O)


def reference(x, w1, b1, w2, b2, gamma, beta):
    B, N, D = x.shape
    h = jnp.maximum(x.reshape(B * N, D) @ w1 + b1, 0.0)
    y = h @ w2 + b2
    mean = jnp.mean(y, axis=-1, keepdims=True)
    var = jnp.mean((y - mean) ** 2, axis=-1, keepdims=True)
    out = (y - mean) / jnp.sqrt(var + LN_EPS) * gamma + beta
    return out.reshape(B, N, -1)


if __name__ == "__main__":
    # Small shapes consistent with the forward: x (B, N, input_dim)
    B, N = 2, 8
    input_dim, hidden_dim, output_dim = 16, 32, 32

    key = jax.random.PRNGKey(0)
    kx, k1, k2, k3, k4 = jax.random.split(key, 5)

    x = jax.random.normal(kx, (B, N, input_dim), dtype=jnp.float32)

    # Deterministic synthetic parameters (shapes from nn.Linear / nn.LayerNorm).
    w1 = jax.random.normal(k1, (input_dim, hidden_dim), dtype=jnp.float32) * 0.1
    b1 = jax.random.normal(k2, (hidden_dim,), dtype=jnp.float32) * 0.1
    w2 = jax.random.normal(k3, (hidden_dim, output_dim), dtype=jnp.float32) * 0.1
    b2 = jax.random.normal(k4, (output_dim,), dtype=jnp.float32) * 0.1
    gamma = jnp.ones((output_dim,), dtype=jnp.float32)   # LayerNorm weight init
    beta = jnp.zeros((output_dim,), dtype=jnp.float32)   # LayerNorm bias init

    ref = reference(x, w1, b1, w2, b2, gamma, beta)

    # f32 MXU operands: tight check against the f32 reference.
    out_f32 = rowwise_encoder(x, w1, b1, w2, b2, gamma, beta,
                              compute_dtype=jnp.float32)
    jax.block_until_ready(out_f32)
    assert out_f32.shape == (B, N, output_dim)
    assert jnp.allclose(out_f32, ref, atol=1e-5, rtol=1e-5), "f32 mismatch vs reference"

    # Default bf16 MXU operands (v6e/v7x fast path); f32 accumulate + f32 LayerNorm.
    out_bf16 = rowwise_encoder(x, w1, b1, w2, b2, gamma, beta)
    jax.block_until_ready(out_bf16)
    assert out_bf16.shape == (B, N, output_dim)
    assert jnp.allclose(out_bf16, ref, atol=5e-2, rtol=5e-2), "bf16 mismatch vs reference"

    print("KERNEL_OK")
</pallas_src>

<mosaic_0001>
module attributes {stable_mosaic.version = 11 : i64} {
  func.func @_rowwise_encoder_kernel(%arg0: i32, %arg1: i32, %arg2: memref<16x16xf32, #tpu.memory_space<vmem>>, %arg3: memref<16x32xf32, #tpu.memory_space<vmem>>, %arg4: memref<1x32xf32, #tpu.memory_space<vmem>>, %arg5: memref<32x128xf32, #tpu.memory_space<vmem>>, %arg6: memref<1x128xf32, #tpu.memory_space<vmem>>, %arg7: memref<1x128xf32, #tpu.memory_space<vmem>>, %arg8: memref<1x128xf32, #tpu.memory_space<vmem>>, %arg9: memref<16x128xf32, #tpu.memory_space<vmem>>, %arg10: memref<16x128xf32, #tpu.memory_space<vmem>>) attributes {dimension_semantics = [#tpu.dimension_semantics<parallel>, #tpu.dimension_semantics<arbitrary>], iteration_bounds = array<i64: 1, 1>, scalar_prefetch = 0 : i64, scratch_operands = 1 : i64, tpu.core_type = #tpu.core_type<tc>, window_params = [{transform_indices = @transform_0, window_bounds = array<i64: 16, 16>}, {pipeline_mode = #tpu.pipeline_mode<synchronous>, transform_indices = @transform_1, window_bounds = array<i64: 16, 32>}, {pipeline_mode = #tpu.pipeline_mode<synchronous>, transform_indices = @transform_2, window_bounds = array<i64: 1, 32>}, {pipeline_mode = #tpu.pipeline_mode<synchronous>, transform_indices = @transform_3, window_bounds = array<i64: 32, 128>}, {pipeline_mode = #tpu.pipeline_mode<synchronous>, transform_indices = @transform_4, window_bounds = array<i64: 1, 128>}, {pipeline_mode = #tpu.pipeline_mode<synchronous>, transform_indices = @transform_5, window_bounds = array<i64: 1, 128>}, {pipeline_mode = #tpu.pipeline_mode<synchronous>, transform_indices = @transform_6, window_bounds = array<i64: 1, 128>}, {transform_indices = @transform_7, window_bounds = array<i64: 16, 128>}]} {
    %c0 = arith.constant 0 : index
    %c0_0 = arith.constant 0 : index
    %0 = vector.load %arg2[%c0, %c0_0] : memref<16x16xf32, #tpu.memory_space<vmem>>, vector<16x16xf32>
    %c0_1 = arith.constant 0 : index
    %c0_2 = arith.constant 0 : index
    %1 = vector.load %arg3[%c0_1, %c0_2] : memref<16x32xf32, #tpu.memory_space<vmem>>, vector<16x32xf32>
    %cst = arith.constant dense<0.000000e+00> : vector<16x32xf32>
    %2 = tpu.matmul %0, %1, %cst {dimension_numbers = #tpu.dot_dimension_numbers<[1], [0], [0], [1], [0, 0, 1, 1], [], []>} : vector<16x16xf32>, vector<16x32xf32>, vector<16x32xf32> -> vector<16x32xf32>
    %c0_3 = arith.constant 0 : index
    %c0_4 = arith.constant 0 : index
    %3 = vector.load %arg4[%c0_3, %c0_4] : memref<1x32xf32, #tpu.memory_space<vmem>>, vector<1x32xf32>
    %4 = vector.broadcast %3 : vector<1x32xf32> to vector<16x32xf32>
    %5 = arith.addf %2, %4 : vector<16x32xf32>
    %cst_5 = arith.constant 0.000000e+00 : f32
    %6 = vector.broadcast %cst_5 : f32 to vector<16x32xf32>
    %7 = arith.maximumf %5, %6 : vector<16x32xf32>
    %c0_6 = arith.constant 0 : index
    %c0_7 = arith.constant 0 : index
    %8 = vector.load %arg5[%c0_6, %c0_7] : memref<32x128xf32, #tpu.memory_space<vmem>>, vector<32x128xf32>
    %cst_8 = arith.constant dense<0.000000e+00> : vector<16x128xf32>
    %9 = tpu.matmul %7, %8, %cst_8 {dimension_numbers = #tpu.dot_dimension_numbers<[1], [0], [0], [1], [0, 0, 1, 1], [], []>} : vector<16x32xf32>, vector<32x128xf32>, vector<16x128xf32> -> vector<16x128xf32>
    %c0_9 = arith.constant 0 : index
    %c0_10 = arith.constant 0 : index
    %10 = vector.load %arg6[%c0_9, %c0_10] : memref<1x128xf32, #tpu.memory_space<vmem>>, vector<1x128xf32>
    %11 = vector.broadcast %10 : vector<1x128xf32> to vector<16x128xf32>
    %12 = arith.addf %9, %11 : vector<16x128xf32>
    %cst_11 = arith.constant dense<0.000000e+00> : vector<16xf32>
    %13 = vector.multi_reduction <add>, %12, %cst_11 [1] : vector<16x128xf32> to vector<16xf32>
    %14 = vector.shape_cast %13 : vector<16xf32> to vector<16x1xf32>
    %cst_12 = arith.constant 3.125000e-02 : f32
    %15 = vector.broadcast %cst_12 : f32 to vector<16x1xf32>
    %16 = arith.mulf %14, %15 : vector<16x1xf32>
    %17 = vector.broadcast %16 : vector<16x1xf32> to vector<16x128xf32>
    %18 = arith.subf %12, %17 : vector<16x128xf32>
    %19 = arith.mulf %18, %18 : vector<16x128xf32>
    %cst_13 = arith.constant dense<0.000000e+00> : vector<16xf32>
    %20 = vector.multi_reduction <add>, %19, %cst_13 [1] : vector<16x128xf32> to vector<16xf32>
    %21 = vector.shape_cast %20 : vector<16xf32> to vector<16x1xf32>
    %22 = arith.mulf %16, %16 : vector<16x1xf32>
    %cst_14 = arith.constant 9.600000e+01 : f32
    %23 = vector.broadcast %cst_14 : f32 to vector<16x1xf32>
    %24 = arith.mulf %23, %22 : vector<16x1xf32>
    %25 = arith.subf %21, %24 : vector<16x1xf32>
    %cst_15 = arith.constant 3.125000e-02 : f32
    %26 = vector.broadcast %cst_15 : f32 to vector<16x1xf32>
    %27 = arith.mulf %25, %26 : vector<16x1xf32>
    %cst_16 = arith.constant 0.000000e+00 : f32
    %28 = vector.broadcast %cst_16 : f32 to vector<16x1xf32>
    %29 = arith.maximumf %27, %28 : vector<16x1xf32>
    %cst_17 = arith.constant 9.99999974E-6 : f32
    %30 = vector.broadcast %cst_17 : f32 to vector<16x1xf32>
    %31 = arith.addf %29, %30 : vector<16x1xf32>
    %32 = math.rsqrt %31 : vector<16x1xf32>
    %33 = vector.broadcast %32 : vector<16x1xf32> to vector<16x128xf32>
    %34 = arith.mulf %18, %33 : vector<16x128xf32>
    %c0_18 = arith.constant 0 : index
    %c0_19 = arith.constant 0 : index
    %35 = vector.load %arg7[%c0_18, %c0_19] : memref<1x128xf32, #tpu.memory_space<vmem>>, vector<1x128xf32>
    %36 = vector.broadcast %35 : vector<1x128xf32> to vector<16x128xf32>
    %37 = arith.mulf %34, %36 : vector<16x128xf32>
    %c0_20 = arith.constant 0 : index
    %c0_21 = arith.constant 0 : index
    %38 = vector.load %arg8[%c0_20, %c0_21] : memref<1x128xf32, #tpu.memory_space<vmem>>, vector<1x128xf32>
    %39 = vector.broadcast %38 : vector<1x128xf32> to vector<16x128xf32>
    %40 = arith.addf %37, %39 : vector<16x128xf32>
    %c0_22 = arith.constant 0 : index
    %c0_23 = arith.constant 0 : index
    %41 = vector.load %arg9[%c0_22, %c0_23] : memref<16x128xf32, #tpu.memory_space<vmem>>, vector<16x128xf32>
    tpu.vector_store %arg9[%c0_22, %c0_23], %40 {strides = array<i32>} : memref<16x128xf32, #tpu.memory_space<vmem>>, vector<16x128xf32>,
    return
  }
  func.func @transform_0(%arg0: i32, %arg1: i32) -> (i32, i32) {
    %c0_i32 = arith.constant 0 : i32
    %c0_i32_0 = arith.constant 0 : i32
    return %arg0, %c0_i32 : i32, i32
  }
  func.func @transform_1(%arg0: i32, %arg1: i32) -> (i32, i32) {
    %c0_i32 = arith.constant 0 : i32
    %c0_i32_0 = arith.constant 0 : i32
    return %c0_i32, %arg1 : i32, i32
  }
  func.func @transform_2(%arg0: i32, %arg1: i32) -> (i32, i32) {
    %c0_i32 = arith.constant 0 : i32
    %c0_i32_0 = arith.constant 0 : i32
    return %c0_i32, %arg1 : i32, i32
  }
  func.func @transform_3(%arg0: i32, %arg1: i32) -> (i32, i32) {
    %c0_i32 = arith.constant 0 : i32
    %c0_i32_0 = arith.constant 0 : i32
    return %arg1, %c0_i32 : i32, i32
  }
  func.func @transform_4(%arg0: i32, %arg1: i32) -> (i32, i32) {
    %c0_i32 = arith.constant 0 : i32
    %c0_i32_0 = arith.constant 0 : i32
    %c0_i32_1 = arith.constant 0 : i32
    return %c0_i32, %c0_i32_0 : i32, i32
  }
  func.func @transform_5(%arg0: i32, %arg1: i32) -> (i32, i32) {
    %c0_i32 = arith.constant 0 : i32
    %c0_i32_0 = arith.constant 0 : i32
    %c0_i32_1 = arith.constant 0 : i32
    return %c0_i32, %c0_i32_0 : i32, i32
  }
  func.func @transform_6(%arg0: i32, %arg1: i32) -> (i32, i32) {
    %c0_i32 = arith.constant 0 : i32
    %c0_i32_0 = arith.constant 0 : i32
    %c0_i32_1 = arith.constant 0 : i32
    return %c0_i32, %c0_i32_0 : i32, i32
  }
  func.func @transform_7(%arg0: i32, %arg1: i32) -> (i32, i32) {
    %c0_i32 = arith.constant 0 : i32
    %c0_i32_0 = arith.constant 0 : i32
    return %arg0, %c0_i32 : i32, i32
  }
}

</mosaic_0001>

<llo_original>
// kernel: rowwise_encoder.1
$region0: #{rowwise_encoder.1}
  #allocation0 [shape = 'u32[]', space=smem, size = 0x4, offset = 0x4, fixed_abs, tag = 'smem constant byte address 0x4 - core index']
  #allocation1 [shape = 'u32[72,128]{1,0:T(1,128)}', space=vmem, size = 0x9000, scoped, tag = 'internal scratch']
  #allocation2 [shape = 'f32[16,128]{1,0:T(8,128)}', space=vmem, size = 0x2000, scoped, tag = 'scratch operand']
  %s0 = inlined_call_operand.vmem [shape: f32[16,16], index: 0, kind: input, shape index: {}]
  %s1 = inlined_call_operand.vmem [shape: f32[16,32], index: 1, kind: input, shape index: {}]
  %s2 = inlined_call_operand.vmem [shape: f32[1,32], index: 2, kind: input, shape index: {}]
  %s3 = inlined_call_operand.vmem [shape: f32[32,128], index: 3, kind: input, shape index: {}]
  %s4 = inlined_call_operand.vmem [shape: f32[1,128], index: 4, kind: input, shape index: {}]
  %s5 = inlined_call_operand.vmem [shape: f32[1,128], index: 5, kind: input, shape index: {}]
  %s6 = inlined_call_operand.vmem [shape: f32[1,128], index: 6, kind: input, shape index: {}]
  %s7 = inlined_call_operand.vmem [shape: f32[16,128], index: 7, kind: output, shape index: {}]
  %s8 = sld [smem:[#allocation0]]
  $region38: #{rowwise_encoder.1} parent=0
    _
  %s10 = ssub.s32 1, %s8
  %s11 = scalar_select 0, %s10, %s8
  // Predicated region
  $region2: #{rowwise_encoder.1} parent=0 // pred_check
    _
  $region3: #{rowwise_encoder.1} parent=0 // pred_check_branch
    %13 = sbr.rel (0) target = $region5
  $region4: #{rowwise_encoder.1} parent=0 // pred_region
    _
  $region5: #{rowwise_encoder.1} parent=0 // pred_fallthru
    _
  // Predicated region
  $region6: #{rowwise_encoder.1} parent=0 // pred_check
    _
  $region7: #{rowwise_encoder.1} parent=0 // pred_check_branch
    %15 = sbr.rel (0) target = $region9
  $region8: #{rowwise_encoder.1} parent=0 // pred_region
    _
  $region9: #{rowwise_encoder.1} parent=0 // pred_fallthru
    _
  // Predicated region
  $region10: #{rowwise_encoder.1} parent=0 // pred_check
    _
  $region11: #{rowwise_encoder.1} parent=0 // pred_check_branch
    %17 = sbr.rel (0) target = $region13
  $region12: #{rowwise_encoder.1} parent=0 // pred_region
    _
  $region13: #{rowwise_encoder.1} parent=0 // pred_fallthru
    _
  // Predicated region
  $region14: #{rowwise_encoder.1} parent=0 // pred_check
    _
  $region15: #{rowwise_encoder.1} parent=0 // pred_check_branch
    %19 = sbr.rel (0) target = $region17
  $region16: #{rowwise_encoder.1} parent=0 // pred_region
    _
  $region17: #{rowwise_encoder.1} parent=0 // pred_fallthru
    _
  // Predicated region
  $region18: #{rowwise_encoder.1} parent=0 // pred_check
    _
  $region19: #{rowwise_encoder.1} parent=0 // pred_check_branch
    %21 = sbr.rel (0) target = $region21
  $region20: #{rowwise_encoder.1} parent=0 // pred_region
    _
  $region21: #{rowwise_encoder.1} parent=0 // pred_fallthru
    _
  // Predicated region
  $region22: #{rowwise_encoder.1} parent=0 // pred_check
    _
  $region23: #{rowwise_encoder.1} parent=0 // pred_check_branch
    %23 = sbr.rel (0) target = $region25
  $region24: #{rowwise_encoder.1} parent=0 // pred_region
    _
  $region25: #{rowwise_encoder.1} parent=0 // pred_fallthru
    _
  // Predicated region
  $region26: #{rowwise_encoder.1} parent=0 // pred_check
    _
  $region27: #{rowwise_encoder.1} parent=0 // pred_check_branch
    %25 = sbr.rel (0) target = $region29
  $region28: #{rowwise_encoder.1} parent=0 // pred_region
    _
  $region29: #{rowwise_encoder.1} parent=0 // pred_fallthru
    _
  %v26 = vld [vmem:[%s0] sm:$0xff]
  %v27 = vld [vmem:[%s0 + $0x8] sm:$0xff]
  %v28 = vld [vmem:[%s1] sm:$0xff]
  %v29 = vld [vmem:[%s1 + $0x8] sm:$0xff]
  %v30 = vld [vmem:[%s2] sm:$0x1]
  %v32 = vperm.slane %v30, 0
  %vm34 = vcmask 130048
  %v36 = vsel %vm34, %v26, 0
  %v39 = vsel %vm34, %v27, 0
  %41 = vmatpush.msra.mxu0 0.0
  %42 = vmatpush.msra.mxu0 0.0
  %43 = vmatpush.msra.mxu0 0.0
  %44 = vmatpush.msra.mxu0 0.0
  %45 = vmatpush.msra.mxu0 0.0
  %46 = vmatpush.msra.mxu0 0.0
  %47 = vmatpush.msra.mxu0 0.0
  %48 = vmatpush.msra.mxu0 0.0
  %49 = vmatpush.msra.mxu0 0.0
  %50 = vmatpush.msra.mxu0 0.0
  %51 = vmatpush.msra.mxu0 0.0
  %52 = vmatpush.msra.mxu0 0.0
  %53 = vmatpush.msra.mxu0 0.0
  %54 = vmatpush.msra.mxu0 0.0
  %55 = vmatpush.msra.mxu0 %v29
  %56 = vmatpush.msra.mxu0 %v28
  %57 = vmatmul.f32.gmra.mxu0 %v36
  %v58 = vpop.f32.mrf.mxu0
  %v59 = vadd.f32 %v32, %v58
  %60 = vmatmul.f32.gmra.mxu0 %v39
  %v61 = vpop.f32.mrf.mxu0
  %v62 = vadd.f32 %v32, %v61
  %63 = vdwg.mxu0
  %v64 = vmax.f32 %v59, 0.0
  %v65 = vmax.f32 %v62, 0.0
  %v66 = vld [vmem:[%s3] sm:$0xff]
  %v67 = vld [vmem:[%s3 + $0x8] sm:$0xff]
  %v68 = vld [vmem:[%s3 + $0x10] sm:$0xff]
  %v69 = vld [vmem:[%s3 + $0x18] sm:$0xff]
  %v70 = vld [vmem:[%s4] sm:$0x1]
  %v72 = vperm.slane %v70, 0
  %vm74 = vcmask 261120
  %v76 = vsel %vm74, %v64, 0
  %v79 = vsel %vm74, %v65, 0
  %81 = vmatpush.msra.mxu0 0.0
  %82 = vmatpush.msra.mxu0 0.0
  %83 = vmatpush.msra.mxu0 0.0
  %84 = vmatpush.msra.mxu0 0.0
  %85 = vmatpush.msra.mxu0 0.0
  %86 = vmatpush.msra.mxu0 0.0
  %87 = vmatpush.msra.mxu0 0.0
  %88 = vmatpush.msra.mxu0 0.0
  %89 = vmatpush.msra.mxu0 0.0
  %90 = vmatpush.msra.mxu0 0.0
  %91 = vmatpush.msra.mxu0 0.0
  %92 = vmatpush.msra.mxu0 0.0
  %93 = vmatpush.msra.mxu0 %v69
  %94 = vmatpush.msra.mxu0 %v68
  %95 = vmatpush.msra.mxu0 %v67
  %96 = vmatpush.msra.mxu0 %v66
  %97 = vmatmul.f32.gmra.mxu0 %v76
  %v98 = vpop.f32.mrf.mxu0
  %v99 = vadd.f32 %v72, %v98
  %100 = vmatmul.f32.gmra.mxu0 %v79
  %v101 = vpop.f32.mrf.mxu0
  %v102 = vadd.f32 %v72, %v101
  %103 = vdwg.mxu0
  %104 = vadd.xlane.f32.xlu0 %v99
  %v105 = vpop.xlane.xlu0 %104
  %106 = vadd.xlane.f32.xlu0 %v102
  %v107 = vpop.xlane.xlu0 %106
  %v108 = vmul.f32 %v105, 0.03125
  %v109 = vmul.f32 %v107, 0.03125
  %v110 = vsub.f32 %v99, %v108
  %v111 = vsub.f32 %v102, %v109
  %v112 = vmul.f32 %v110, %v110
  %v113 = vmul.f32 %v111, %v111
  %114 = vadd.xlane.f32.xlu0 %v112
  %v115 = vpop.xlane.xlu0 %114
  %116 = vadd.xlane.f32.xlu0 %v113
  %v117 = vpop.xlane.xlu0 %116
  %v118 = vmul.f32 %v108, %v108
  %v119 = vmul.f32 %v109, %v109
  %v120 = vmul.f32 %v118, 96.0
  %v121 = vmul.f32 %v119, 96.0
  %v122 = vsub.f32 %v115, %v120
  %v123 = vsub.f32 %v117, %v121
  %v124 = vmul.f32 %v122, 0.03125
  %v125 = vmul.f32 %v123, 0.03125
  %v126 = vmax.f32 %v124, 0.0
  %v127 = vmax.f32 %v125, 0.0
  %v128 = vadd.f32 %v126, 1e-05
  %v129 = vadd.f32 %v127, 1e-05
  %v130 = vrsqrt.pop %v128
  %v131 = vmul.f32 %v130, %v128
  %v132 = vmul.f32 %v131, %v130
  %v133 = vmul.f32 0.5, %v132
  %v134 = vsub.f32 1.5, %v133
  %v135 = vmul.f32 %v130, %v134
  %vm136 = vweird.f32 %v128
  %vm137 = vweird.f32 %v130
  %vm138 = vmor %vm136, %vm137
  %v139 = vsel %vm138, %v130, %v135
  %v140 = vrsqrt.pop %v129
  %v141 = vmul.f32 %v140, %v129
  %v142 = vmul.f32 %v141, %v140
  %v143 = vmul.f32 0.5, %v142
  %v144 = vsub.f32 1.5, %v143
  %v145 = vmul.f32 %v140, %v144
  %vm146 = vweird.f32 %v129
  %vm147 = vweird.f32 %v140
  %vm148 = vmor %vm146, %vm147
  %v149 = vsel %vm148, %v140, %v145
  %v150 = vmul.f32 %v110, %v139
  %v151 = vmul.f32 %v111, %v149
  %v152 = vld [vmem:[%s5] sm:$0x1]
  %v154 = vperm.slane %v152, 0
  %v156 = vmul.f32 %v150, %v154
  %v157 = vmul.f32 %v151, %v154
  %v158 = vld [vmem:[%s6] sm:$0x1]
  %v160 = vperm.slane %v158, 0
  %v162 = vadd.f32 %v156, %v160
  %v163 = vadd.f32 %v157, %v160
  %164 = vst [vmem:[%s7] sm:$0xff] %v162
  %165 = vst [vmem:[%s7 + $0x8] sm:$0xff] %v163
  // Predicated region
  $region30: #{rowwise_encoder.1} parent=0 // pred_check
    _
  $region31: #{rowwise_encoder.1} parent=0 // pred_check_branch
    %167 = sbr.rel (0) target = $region33
  $region32: #{rowwise_encoder.1} parent=0 // pred_region
    _
  $region33: #{rowwise_encoder.1} parent=0 // pred_fallthru
    _
  // Predicated region
  $region34: #{rowwise_encoder.1} parent=0 // pred_check
    _
  $region35: #{rowwise_encoder.1} parent=0 // pred_check_branch
    %169 = sbr.rel (0) target = $region37
  $region36: #{rowwise_encoder.1} parent=0 // pred_region
    _
  $region37: #{rowwise_encoder.1} parent=0 // pred_fallthru
    _

</llo_original>
